<compile_context>
chip_gen: v7x
topology: tpu7x:2x2x1
jax: 0.10.0
libtpu: 0.0.40
codegen_flags: <defaults>
</compile_context>

<pallas_src>
import functools
import math

import jax
import jax.numpy as jnp
from jax.experimental import pallas as pl
from jax.experimental.pallas import tpu as pltpu


# --------------------------------------------------------------------------- #
# VMEM / tile-size helpers
# --------------------------------------------------------------------------- #

def _round_down(x: int, m: int) -> int:
    return (x // m) * m


@functools.lru_cache(maxsize=1)
def _vmem_capacity_bytes() -> int:
    try:
        return int(pltpu.get_tpu_info().vmem_capacity_bytes)
    except Exception:
        return 64 * 1024 * 1024  # conservative: v7x per-TensorCore VMEM


def _vmem_limit_bytes() -> int:
    cap = _vmem_capacity_bytes()
    if cap >= 96 * 1024 * 1024:
        # 128 MiB parts (v5e/v6e): leave ~32 MiB of compiler/internal-scratch headroom.
        return cap - 32 * 1024 * 1024
    # 64 MiB parts (v7x): 0.8 * capacity is fine.
    return int(cap * 0.8)


def _row_tile(rows: int, cap: int = 256) -> int:
    """Row (sublane) tile: multiple of 8, capped at `cap`, >= 4 grid steps when
    there is enough work so DMA/compute pipelining has depth even on 1-TC parts."""
    if rows <= 8:
        return rows
    tm = max(8, min(cap, _round_down(rows, 8)))
    while tm > 8 and -(-rows // tm) < 4:
        tm = max(8, _round_down(tm // 2, 8))
    return tm


def _col_tile(K: int, N: int, w_itemsize: int, n_weights: int = 1) -> int:
    """Column (lane) tile of the weight/output N dim.

    Keep the whole weight resident (read exactly once from HBM) when it fits the
    VMEM budget with default double-buffering; otherwise tile N in multiples of 128
    (mandatory for the fp32 c_fc weight on v7x's 64 MiB VMEM)."""
    budget = int(0.6 * _vmem_limit_bytes())
    resident = K * N * w_itemsize * 2 * n_weights        # 2x: double buffering
    if N <= 128 or resident <= budget:
        return N
    tn = budget // (K * w_itemsize * 2 * n_weights)
    tn = max(128, _round_down(tn, 128))
    return min(tn, N)


def _compiler_params(dims):
    return pltpu.CompilerParams(
        dimension_semantics=dims,
        vmem_limit_bytes=_vmem_limit_bytes(),
    )


# --------------------------------------------------------------------------- #
# Kernels
# --------------------------------------------------------------------------- #

def _rmsnorm_matmul_kernel(x_ref, rw_ref, w_ref, hn_ref, y_ref, xn_ref, *, eps):
    """hn = RMSNorm(x) * w_rms ;  y[:, j-tile] = hn @ W[:, j-tile].

    Grid = (row_tiles, col_tiles).  The normalization is computed once per row tile
    (j == 0), cached in a VMEM scratch and reused for every column tile."""
    @pl.when(pl.program_id(1) == 0)
    def _():
        x32 = x_ref[...].astype(jnp.float32)
        nrm = jnp.mean(x32 * x32, axis=-1, keepdims=True)
        xn = x32 * jax.lax.rsqrt(nrm + eps)
        if x_ref.dtype != jnp.float32:
            # torch parity: round to the input dtype before the fp32 weight scale.
            xn = xn.astype(x_ref.dtype).astype(jnp.float32)
        xn = xn * rw_ref[...]                              # rms weight pre-cast to fp32
        xn_ref[...] = xn
        hn_ref[...] = xn.astype(hn_ref.dtype)              # normalized residual output
    y_ref[...] = jnp.dot(xn_ref[...], w_ref[...],
                         preferred_element_type=jnp.float32).astype(y_ref.dtype)


def _rmsnorm_glu_kernel(x_ref, rw_ref, wu_ref, wv_ref, hn_ref, y_ref, xn_ref, *, eps):
    """hn = RMSNorm(x) * w_rms ;  y = (hn @ Wu) * silu(hn @ Wv)  (per column tile)."""
    @pl.when(pl.program_id(1) == 0)
    def _():
        x32 = x_ref[...].astype(jnp.float32)
        nrm = jnp.mean(x32 * x32, axis=-1, keepdims=True)
        xn = x32 * jax.lax.rsqrt(nrm + eps)
        if x_ref.dtype != jnp.float32:
            xn = xn.astype(x_ref.dtype).astype(jnp.float32)
        xn = xn * rw_ref[...]
        xn_ref[...] = xn
        hn_ref[...] = xn.astype(hn_ref.dtype)
    xn = xn_ref[...]
    zu = jnp.dot(xn, wu_ref[...], preferred_element_type=jnp.float32)
    zv = jnp.dot(xn, wv_ref[...], preferred_element_type=jnp.float32)
    y_ref[...] = (zu * (zv * jax.nn.sigmoid(zv))).astype(y_ref.dtype)


def _matmul_residual_kernel(x_ref, w_ref, r_ref, o_ref):
    """o[:, j-tile] = residual[:, j-tile] + x @ W[:, j-tile]  (fp32 MXU accumulate)."""
    acc = jnp.dot(x_ref[...], w_ref[...], preferred_element_type=jnp.float32)
    o_ref[...] = (r_ref[...].astype(jnp.float32) + acc).astype(o_ref.dtype)


def _attn_kernel(qkv_ref, o_ref, *, n_head, hd, scale):
    """Full (unmasked) softmax attention for one batch element.

    Reads the fused (T, 3C) qkv block, slices q/k/v and heads in VMEM (no XLA
    transposes), writes the (T, C) output lane-dense in one store."""
    C = n_head * hd
    qkv = qkv_ref[0].astype(jnp.float32)                   # (T, 3C)
    outs = []
    for h in range(n_head):                                # unrolled at trace time
        q = qkv[:, h * hd:(h + 1) * hd]
        k = qkv[:, C + h * hd:C + (h + 1) * hd]
        v = qkv[:, 2 * C + h * hd:2 * C + (h + 1) * hd]
        # q @ k^T without an explicit transpose (contract last dims on the MXU).
        s = jax.lax.dot_general(q, k, (((1,), (1,)), ((), ())),
                                preferred_element_type=jnp.float32) * scale
        m = jnp.max(s, axis=-1, keepdims=True)
        p = jnp.exp(s - m)
        l = jnp.sum(p, axis=-1, keepdims=True)
        o = jnp.dot(p, v, preferred_element_type=jnp.float32)
        outs.append(o * pl.reciprocal(l, approx=True))
    o_ref[0] = jnp.concatenate(outs, axis=-1).astype(o_ref.dtype)


# --------------------------------------------------------------------------- #
# Wrappers
# --------------------------------------------------------------------------- #

def rmsnorm_matmul(x2d, rms_w, w, eps: float = 1e-6):
    """Returns (hn, hn @ w) where hn = RMSNorm(x2d) * rms_w."""
    rows, K = x2d.shape
    K2, N = w.shape
    assert K == K2
    out_dtype = jnp.promote_types(x2d.dtype, w.dtype)
    hn_dtype = jnp.promote_types(x2d.dtype, jnp.float32)
    rw = rms_w.astype(jnp.float32).reshape(1, K)

    tm = _row_tile(rows)
    tn = _col_tile(K, N, jnp.dtype(w.dtype).itemsize)
    grid = (pl.cdiv(rows, tm), pl.cdiv(N, tn))

    return pl.pallas_call(
        functools.partial(_rmsnorm_matmul_kernel, eps=eps),
        out_shape=(jax.ShapeDtypeStruct((rows, K), hn_dtype),
                   jax.ShapeDtypeStruct((rows, N), out_dtype)),
        grid_spec=pltpu.PrefetchScalarGridSpec(
            num_scalar_prefetch=0,
            grid=grid,
            in_specs=[pl.BlockSpec((tm, K), lambda i, j: (i, 0)),
                      pl.BlockSpec((1, K), lambda i, j: (0, 0)),
                      pl.BlockSpec((K, tn), lambda i, j: (0, j))],
            out_specs=[pl.BlockSpec((tm, K), lambda i, j: (i, 0)),
                       pl.BlockSpec((tm, tn), lambda i, j: (i, j))],
            scratch_shapes=[pltpu.VMEM((tm, K), jnp.float32)],
        ),
        compiler_params=_compiler_params(("parallel", "arbitrary")),
    )(x2d, rw, w)


def rmsnorm_glu(x2d, rms_w, wu, wv, eps: float = 1e-6):
    """Returns (hn, (hn @ wu) * silu(hn @ wv)) where hn = RMSNorm(x2d) * rms_w."""
    rows, K = x2d.shape
    K2, F = wu.shape
    assert K == K2 and wv.shape == (K, F)
    out_dtype = jnp.promote_types(x2d.dtype, wu.dtype)
    hn_dtype = jnp.promote_types(x2d.dtype, jnp.float32)
    rw = rms_w.astype(jnp.float32).reshape(1, K)

    tm = _row_tile(rows)
    tn = _col_tile(K, F, jnp.dtype(wu.dtype).itemsize, n_weights=2)
    grid = (pl.cdiv(rows, tm), pl.cdiv(F, tn))

    return pl.pallas_call(
        functools.partial(_rmsnorm_glu_kernel, eps=eps),
        out_shape=(jax.ShapeDtypeStruct((rows, K), hn_dtype),
                   jax.ShapeDtypeStruct((rows, F), out_dtype)),
        grid_spec=pltpu.PrefetchScalarGridSpec(
            num_scalar_prefetch=0,
            grid=grid,
            in_specs=[pl.BlockSpec((tm, K), lambda i, j: (i, 0)),
                      pl.BlockSpec((1, K), lambda i, j: (0, 0)),
                      pl.BlockSpec((K, tn), lambda i, j: (0, j)),
                      pl.BlockSpec((K, tn), lambda i, j: (0, j))],
            out_specs=[pl.BlockSpec((tm, K), lambda i, j: (i, 0)),
                       pl.BlockSpec((tm, tn), lambda i, j: (i, j))],
            scratch_shapes=[pltpu.VMEM((tm, K), jnp.float32)],
        ),
        compiler_params=_compiler_params(("parallel", "arbitrary")),
    )(x2d, rw, wu, wv)


def matmul_residual(x2d, w, residual):
    """out = residual + x2d @ w   (fused residual add, N-tiled weight)."""
    rows, K = x2d.shape
    K2, N = w.shape
    assert K == K2 and residual.shape == (rows, N)
    out_dtype = jnp.promote_types(jnp.promote_types(x2d.dtype, w.dtype), residual.dtype)

    tm = _row_tile(rows)
    tn = _col_tile(K, N, jnp.dtype(w.dtype).itemsize)
    grid = (pl.cdiv(rows, tm), pl.cdiv(N, tn))

    return pl.pallas_call(
        _matmul_residual_kernel,
        out_shape=jax.ShapeDtypeStruct((rows, N), out_dtype),
        grid_spec=pltpu.PrefetchScalarGridSpec(
            num_scalar_prefetch=0,
            grid=grid,
            in_specs=[pl.BlockSpec((tm, K), lambda i, j: (i, 0)),
                      pl.BlockSpec((K, tn), lambda i, j: (0, j)),
                      pl.BlockSpec((tm, tn), lambda i, j: (i, j))],
            out_specs=pl.BlockSpec((tm, tn), lambda i, j: (i, j)),
        ),
        compiler_params=_compiler_params(("parallel", "arbitrary")),
    )(x2d, w, residual)


def attention(qkv3, n_head: int, scale: float):
    """Full softmax attention.  qkv3 is (B, T, 3C) with q|k|v concatenated on the
    last axis; output is (B, T, C) already in 'b t (h d)' order."""
    B, T, C3 = qkv3.shape
    C = C3 // 3
    hd = C // n_head
    return pl.pallas_call(
        functools.partial(_attn_kernel, n_head=n_head, hd=hd, scale=scale),
        out_shape=jax.ShapeDtypeStruct((B, T, C), qkv3.dtype),
        grid_spec=pltpu.PrefetchScalarGridSpec(
            num_scalar_prefetch=0,
            grid=(B,),
            in_specs=[pl.BlockSpec((1, T, C3), lambda b: (b, 0, 0))],
            out_specs=pl.BlockSpec((1, T, C), lambda b: (b, 0, 0)),
        ),
        compiler_params=_compiler_params(("parallel",)),
    )(qkv3)


# --------------------------------------------------------------------------- #
# Block forward (use_nViT = 0)
# --------------------------------------------------------------------------- #

def block_forward(h, params, n_head: int, eps: float = 1e-6):
    B, T, C = h.shape
    hd = C // n_head
    rows = B * T
    h2 = h.reshape(rows, C)

    # One-time weight packing for the fused kernels.  In a real model these would be
    # stored pre-fused so no XLA-side copy happens per call.
    w_qkv = jnp.concatenate([params["wq"], params["wk"], params["wv"]], axis=1)
    F = params["wfc"].shape[1] // 2
    wfc_u = params["wfc"][:, :F]
    wfc_v = params["wfc"][:, F:]

    # --- attention branch:  hn1 = rmsnorm(h);  qkv = hn1 @ [Wq|Wk|Wv] ---
    hn1, qkv = rmsnorm_matmul(h2, params["rms_att_w"], w_qkv, eps=eps)
    attn = attention(qkv.reshape(B, T, 3 * C), n_head, scale=1.0 / math.sqrt(hd))
    # h = hn1 + att_c_proj(attn)   (torch overwrites h with the rmsnorm output)
    h2 = matmul_residual(attn.reshape(rows, C), params["wo"], hn1)

    # --- MLP branch:  hn2 = rmsnorm(h);  x_mlp = u * silu(v);  out = hn2 + proj ---
    hn2, x_mlp = rmsnorm_glu(h2, params["rms_mlp_w"], wfc_u, wfc_v, eps=eps)
    out = matmul_residual(x_mlp, params["wproj"], hn2)

    return out.reshape(B, T, C)


# --------------------------------------------------------------------------- #
# Pure-JAX reference (mirrors the torch Block forward exactly, use_nViT = 0)
# --------------------------------------------------------------------------- #

def block_forward_ref(h, params, n_head: int, eps: float = 1e-6):
    B, T, C = h.shape
    hd = C // n_head

    def rms(x, w):
        x32 = x.astype(jnp.float32)
        nrm = jnp.mean(x32 * x32, axis=-1, keepdims=True)
        xn = (x32 * jax.lax.rsqrt(nrm + eps)).astype(x.dtype)
        return xn * w

    h = rms(h, params["rms_att_w"])                # h is overwritten, as in torch
    q = h @ params["wq"]
    k = h @ params["wk"]
    v = h @ params["wv"]

    def heads(x):
        return x.reshape(B, T, n_head, hd).transpose(0, 2, 1, 3)

    qh, kh, vh = heads(q), heads(k), heads(v)
    s = jnp.einsum("bhtd,bhsd->bhts", qh, kh) * (1.0 / math.sqrt(hd))
    p = jax.nn.softmax(s, axis=-1)
    o = jnp.einsum("bhts,bhsd->bhtd", p, vh)
    h_att = o.transpose(0, 2, 1, 3).reshape(B, T, C) @ params["wo"]
    h = h + h_att                                  # residual on the *normalized* h

    h = rms(h, params["rms_mlp_w"])                # h overwritten again
    uv = h @ params["wfc"]
    u, vv = jnp.split(uv, 2, axis=-1)
    x_mlp = u * jax.nn.silu(vv)
    h = h + x_mlp @ params["wproj"]
    return h


# --------------------------------------------------------------------------- #
# Test
# --------------------------------------------------------------------------- #

if __name__ == "__main__":
    key = jax.random.PRNGKey(0)
    B, T, C, n_head = 2, 8, 32, 4                  # small; n_embd divisible by n_head
    ks = jax.random.split(key, 7)
    sc = 1.0 / math.sqrt(C)
    params = {
        "rms_att_w": jnp.ones((C,), jnp.float32),          # torch.ones(embdim)
        "rms_mlp_w": jnp.ones((C,), jnp.float32),
        "wq": jax.random.normal(ks[1], (C, C), jnp.float32) * sc,
        "wk": jax.random.normal(ks[2], (C, C), jnp.float32) * sc,
        "wv": jax.random.normal(ks[3], (C, C), jnp.float32) * sc,
        "wo": jax.random.normal(ks[4], (C, C), jnp.float32) * sc,
        "wfc": jax.random.normal(ks[5], (C, 8 * C), jnp.float32) * sc,
        "wproj": jax.random.normal(ks[6], (4 * C, C), jnp.float32) * (1.0 / math.sqrt(4 * C)),
    }
    h = jax.random.normal(ks[0], (B, T, C), jnp.float32)

    out = jax.block_until_ready(block_forward(h, params, n_head))

    ref = block_forward_ref(h, params, n_head)
    assert out.shape == h.shape, (out.shape, h.shape)
    # Tolerance covers MXU default-precision differences and the approx reciprocal.
    max_err = float(jnp.max(jnp.abs(out - ref)))
    assert jnp.allclose(out, ref, atol=5e-2, rtol=5e-2), f"mismatch vs reference, max_err={max_err}"

    print("KERNEL_OK")
</pallas_src>

<mosaic_0001>
module attributes {stable_mosaic.version = 11 : i64} {
  func.func @_rmsnorm_matmul_kernel(%arg0: i32, %arg1: i32, %arg2: memref<8x32xf32, #tpu.memory_space<vmem>>, %arg3: memref<1x32xf32, #tpu.memory_space<vmem>>, %arg4: memref<32x96xf32, #tpu.memory_space<vmem>>, %arg5: memref<8x32xf32, #tpu.memory_space<vmem>>, %arg6: memref<8x96xf32, #tpu.memory_space<vmem>>, %arg7: memref<8x32xf32, #tpu.memory_space<vmem>>) attributes {dimension_semantics = [#tpu.dimension_semantics<parallel>, #tpu.dimension_semantics<arbitrary>], iteration_bounds = array<i64: 2, 1>, scalar_prefetch = 0 : i64, scratch_operands = 1 : i64, tpu.core_type = #tpu.core_type<tc>, window_params = [{transform_indices = @transform_0, window_bounds = array<i64: 8, 32>}, {pipeline_mode = #tpu.pipeline_mode<synchronous>, transform_indices = @transform_1, window_bounds = array<i64: 1, 32>}, {transform_indices = @transform_2, window_bounds = array<i64: 32, 96>}, {transform_indices = @transform_3, window_bounds = array<i64: 8, 32>}, {transform_indices = @transform_4, window_bounds = array<i64: 8, 96>}]} {
    %c0_i32 = arith.constant 0 : i32
    %0 = arith.cmpi eq, %arg1, %c0_i32 : i32
    %1 = arith.extui %0 : i1 to i32
    %c0_i32_0 = arith.constant 0 : i32
    %2 = arith.cmpi ne, %1, %c0_i32_0 : i32
    scf.if %2 {
      %c0_6 = arith.constant 0 : index
      %c0_7 = arith.constant 0 : index
      %7 = vector.load %arg2[%c0_6, %c0_7] : memref<8x32xf32, #tpu.memory_space<vmem>>, vector<8x32xf32>
      %8 = arith.mulf %7, %7 : vector<8x32xf32>
      %cst_8 = arith.constant dense<0.000000e+00> : vector<8xf32>
      %9 = vector.multi_reduction <add>, %8, %cst_8 [1] : vector<8x32xf32> to vector<8xf32>
      %10 = vector.shape_cast %9 : vector<8xf32> to vector<8x1xf32>
      %cst_9 = arith.constant 3.200000e+01 : f32
      %11 = vector.broadcast %cst_9 : f32 to vector<8x1xf32>
      %12 = arith.divf %10, %11 : vector<8x1xf32>
      %cst_10 = arith.constant 9.99999997E-7 : f32
      %13 = vector.broadcast %cst_10 : f32 to vector<8x1xf32>
      %14 = arith.addf %12, %13 : vector<8x1xf32>
      %15 = math.rsqrt %14 : vector<8x1xf32>
      %16 = vector.broadcast %15 : vector<8x1xf32> to vector<8x32xf32>
      %17 = arith.mulf %7, %16 : vector<8x32xf32>
      %c0_11 = arith.constant 0 : index
      %c0_12 = arith.constant 0 : index
      %18 = vector.load %arg3[%c0_11, %c0_12] : memref<1x32xf32, #tpu.memory_space<vmem>>, vector<1x32xf32>
      %19 = vector.broadcast %18 : vector<1x32xf32> to vector<8x32xf32>
      %20 = arith.mulf %17, %19 : vector<8x32xf32>
      %c0_13 = arith.constant 0 : index
      %c0_14 = arith.constant 0 : index
      %21 = vector.load %arg7[%c0_13, %c0_14] : memref<8x32xf32, #tpu.memory_space<vmem>>, vector<8x32xf32>
      tpu.vector_store %arg7[%c0_13, %c0_14], %20 {strides = array<i32>} : memref<8x32xf32, #tpu.memory_space<vmem>>, vector<8x32xf32>,
      %c0_15 = arith.constant 0 : index
      %c0_16 = arith.constant 0 : index
      %22 = vector.load %arg5[%c0_15, %c0_16] : memref<8x32xf32, #tpu.memory_space<vmem>>, vector<8x32xf32>
      tpu.vector_store %arg5[%c0_15, %c0_16], %20 {strides = array<i32>} : memref<8x32xf32, #tpu.memory_space<vmem>>, vector<8x32xf32>,
    } else {
    }
    %c0 = arith.constant 0 : index
    %c0_1 = arith.constant 0 : index
    %3 = vector.load %arg7[%c0, %c0_1] : memref<8x32xf32, #tpu.memory_space<vmem>>, vector<8x32xf32>
    %c0_2 = arith.constant 0 : index
    %c0_3 = arith.constant 0 : index
    %4 = vector.load %arg4[%c0_2, %c0_3] : memref<32x96xf32, #tpu.memory_space<vmem>>, vector<32x96xf32>
    %cst = arith.constant dense<0.000000e+00> : vector<8x96xf32>
    %5 = tpu.matmul %3, %4, %cst {dimension_numbers = #tpu.dot_dimension_numbers<[1], [0], [0], [1], [0, 0, 1, 1], [], []>} : vector<8x32xf32>, vector<32x96xf32>, vector<8x96xf32> -> vector<8x96xf32>
    %c0_4 = arith.constant 0 : index
    %c0_5 = arith.constant 0 : index
    %6 = vector.load %arg6[%c0_4, %c0_5] : memref<8x96xf32, #tpu.memory_space<vmem>>, vector<8x96xf32>
    tpu.vector_store %arg6[%c0_4, %c0_5], %5 {strides = array<i32>} : memref<8x96xf32, #tpu.memory_space<vmem>>, vector<8x96xf32>,
    return
  }
  func.func @transform_0(%arg0: i32, %arg1: i32) -> (i32, i32) {
    %c0_i32 = arith.constant 0 : i32
    %c0_i32_0 = arith.constant 0 : i32
    return %arg0, %c0_i32 : i32, i32
  }
  func.func @transform_1(%arg0: i32, %arg1: i32) -> (i32, i32) {
    %c0_i32 = arith.constant 0 : i32
    %c0_i32_0 = arith.constant 0 : i32
    %c0_i32_1 = arith.constant 0 : i32
    return %c0_i32, %c0_i32_0 : i32, i32
  }
  func.func @transform_2(%arg0: i32, %arg1: i32) -> (i32, i32) {
    %c0_i32 = arith.constant 0 : i32
    %c0_i32_0 = arith.constant 0 : i32
    return %c0_i32, %arg1 : i32, i32
  }
  func.func @transform_3(%arg0: i32, %arg1: i32) -> (i32, i32) {
    %c0_i32 = arith.constant 0 : i32
    %c0_i32_0 = arith.constant 0 : i32
    return %arg0, %c0_i32 : i32, i32
  }
  func.func @transform_4(%arg0: i32, %arg1: i32) -> (i32, i32) {
    %c0_i32 = arith.constant 0 : i32
    return %arg0, %arg1 : i32, i32
  }
}

</mosaic_0001>

<llo_original>
// kernel: tpu_custom_call.1
$region0: #{tpu_custom_call.1}
  #allocation0 [shape = 'u32[]', space=smem, size = 0x4, offset = 0x4, fixed_abs, tag = 'smem constant byte address 0x4 - core index']
  #allocation1 [shape = 'u32[144,128]{1,0:T(1,128)}', space=vmem, size = 0x12000, scoped, tag = 'internal scratch']
  #allocation2 [shape = 'f32[8,32]{1,0:T(8,128)}', space=vmem, size = 0x1000, scoped, tag = 'scratch operand']
  %s0 = inlined_call_operand.hbm [shape: f32[16,32], index: 0, kind: input, shape index: {}]
  %s1 = inlined_call_operand.vmem [shape: f32[1,32], index: 1, kind: input, shape index: {}]
  %s2 = inlined_call_operand.hbm [shape: f32[32,96], index: 2, kind: input, shape index: {}]
  %s3 = inlined_call_operand.hbm [shape: f32[16,32], index: 3, kind: output, shape index: {0}]
  %s4 = inlined_call_operand.hbm [shape: f32[16,96], index: 4, kind: output, shape index: {1}]
  %5 = xla_tuple %s3, %s4
  %s6 = sld [smem:[#allocation0]]
  $region65: #{tpu_custom_call.1} parent=0
    _
  %s8 = ssub.s32 1, %s6
  %s9 = scalar_select 0, %s8, %s6
  $region1: #{tpu_custom_call.1} parent=0
    #allocation3 [shape = 'u8[8192]{0}', space=vmem, size = 0x2000, scoped, tag = 'input window, operand 0']
    #allocation4 [shape = 's32[2]{0}', space=sflag, size = 0x8, scoped, tag = 'scoped memory for tpu_custom_call.1']
    #allocation5 [shape = 's32[2]{0}', space=sflag, size = 0x8, scoped, tag = 'scoped memory for tpu_custom_call.1']
    #allocation6 [shape = 'u8[16384]{0}', space=vmem, size = 0x4000, scoped, tag = 'input window, operand 2, single buffered']
    #allocation7 [shape = 's32[1]{0}', space=sflag, size = 0x4, scoped, tag = 'scoped memory for tpu_custom_call.1']
    #allocation8 [shape = 'u8[8192]{0}', space=vmem, size = 0x2000, scoped, tag = 'output window, operand 0']
    #allocation9 [shape = 'u8[8192]{0}', space=vmem, size = 0x2000, scoped, tag = 'output window, operand 1']
    #allocation10 [shape = 's32[2]{0}', space=sflag, size = 0x8, scoped, tag = 'scoped memory for tpu_custom_call.1']
    %10 = vsyncpa [#allocation4], 0
    %s11 = scalar_lea.sflag [#allocation4], 1
    %12 = vsyncpa %s11, 0
    %13 = vsyncpa [#allocation7], 0
    %14 = vsyncpa [#allocation5], 0
    %s15 = scalar_lea.sflag [#allocation5], 1
    %16 = vsyncpa %s15, 0
    %17 = vsyncpa [#allocation10], 0
    %s18 = scalar_lea.sflag [#allocation10], 1
    %19 = vsyncpa %s18, 0
    loop: start=0, step=1, limit=4
    $region2: #{tpu_custom_call.1} parent=1 // loop_pre_header
      _
    $region3: #{tpu_custom_call.1} parent=1 // loop_header
      %s21 = sphi 0, %s25
      %p22 = scmp.ge.s32.totalorder %s21, 4
      %s28 = sphi 0, %s40
      %s29 = sphi 0, %s36
      %s30 = sphi 0, %s28
      %s31 = sphi 0, %s29
      %s32 = sphi 0, %s30
      %s33 = sphi 0, %s31
      %s43 = sphi 0, %s45
      %s46 = sphi 0, %s43
      %s47 = sphi 0, %s46
      %s63 = sphi 0, %s47
      %s67 = sphi 0, %s67
      %s69 = sphi 0, %s67
      %s70 = sphi 0, %s69
      %s84 = sphi 0, %s70
      %s90 = sphi 0, %s92
      %s93 = sphi 0, %s90
      %s94 = sphi 0, %s93
      %s110 = sphi 0, %s94
      %s116 = sphi 0, %s118
      %s119 = sphi 0, %s116
      %s120 = sphi 0, %s119
      %s136 = sphi 0, %s120
      %s144 = sphi 0, %s146
      %s147 = sphi 0, %s144
      %s148 = sphi 0, %s147
      %s164 = sphi 0, %s148
    $region4: #{tpu_custom_call.1} parent=1 // loop_header_branch
      %24 = sbr.rel (%p22) target = $region8
    $region5: #{tpu_custom_call.1} parent=1 // loop_body
      %s26 = ssub.s32 %s21, 1
      %s27 = ssub.s32 %s21, 2
      %s34 = sadd.s32 1, %s29
      %p35 = scmp.ge.s32.totalorder %s34, 1
      %s36 = scalar_select %p35, 0, %s34
      %s37 = sadd.s32 1, %s28
      %s38 = scalar_select %p35, %s37, %s28
      %p39 = scmp.ge.s32.totalorder %s38, 2
      %s40 = scalar_select %p39, 0, %s38
      %s41 = ssub.s32 %s28, %s40
      %p42 = scmp.eq.s32.totalorder %s41, 0
      %s44 = sadd.s32 %s43, 1
      %s45 = scalar_select %p42, %s43, %s44
      %p48 = pneg %p42
      %p49 = scmp.eq.s32.totalorder %s21, 1
      %p50 = por %p48, %p49
      %p51 = scmp.ne.s32.totalorder %s43, %s46
      %p52 = scmp.eq.s32.totalorder %s21, 0
      %p53 = por %p51, %p52
      %p54 = scmp.ne.s32.totalorder %s43, %s46
      %p55 = scmp.eq.s32.totalorder %s26, 1
      %p56 = por %p54, %p55
      %p57 = scmp.ne.s32.totalorder %s46, %s47
      %p58 = scmp.eq.s32.totalorder %s26, 0
      %p59 = por %p57, %p58
      %p60 = scmp.ne.s32.totalorder %s46, %s47
      %p61 = scmp.eq.s32.totalorder %s27, 1
      %p62 = por %p60, %p61
      %p64 = scmp.ne.s32.totalorder %s47, %s63
      %p65 = scmp.eq.s32.totalorder %s27, 0
      %p66 = por %p64, %p65
      %s68 = sadd.s32 %s67, 1
      %p71 = scmp.eq.s32.totalorder %s21, 1
      %p72 = scmp.ne.s32.totalorder %s67, %s69
      %p73 = scmp.eq.s32.totalorder %s21, 0
      %p74 = por %p72, %p73
      %p75 = scmp.ne.s32.totalorder %s67, %s69
      %p76 = scmp.eq.s32.totalorder %s26, 1
      %p77 = por %p75, %p76
      %p78 = scmp.ne.s32.totalorder %s69, %s70
      %p79 = scmp.eq.s32.totalorder %s26, 0
      %p80 = por %p78, %p79
      %p81 = scmp.ne.s32.totalorder %s69, %s70
      %p82 = scmp.eq.s32.totalorder %s27, 1
      %p83 = por %p81, %p82
      %p85 = scmp.ne.s32.totalorder %s70, %s84
      %p86 = scmp.eq.s32.totalorder %s27, 0
      %p87 = por %p85, %p86
      %s88 = ssub.s32 %s29, %s36
      %p89 = scmp.eq.s32.totalorder %s88, 0
      %s91 = sadd.s32 %s90, 1
      %s92 = scalar_select %p89, %s90, %s91
      %p95 = pneg %p89
      %p96 = scmp.eq.s32.totalorder %s21, 1
      %p97 = por %p95, %p96
      %p98 = scmp.ne.s32.totalorder %s90, %s93
      %p99 = scmp.eq.s32.totalorder %s21, 0
      %p100 = por %p98, %p99
      %p101 = scmp.ne.s32.totalorder %s90, %s93
      %p102 = scmp.eq.s32.totalorder %s26, 1
      %p103 = por %p101, %p102
      %p104 = scmp.ne.s32.totalorder %s93, %s94
      %p105 = scmp.eq.s32.totalorder %s26, 0
      %p106 = por %p104, %p105
      %p107 = scmp.ne.s32.totalorder %s93, %s94
      %p108 = scmp.eq.s32.totalorder %s27, 1
      %p109 = por %p107, %p108
      %p111 = scmp.ne.s32.totalorder %s94, %s110
      %p112 = scmp.eq.s32.totalorder %s27, 0
      %p113 = por %p111, %p112
      %s114 = ssub.s32 %s28, %s40
      %p115 = scmp.eq.s32.totalorder %s114, 0
      %s117 = sadd.s32 %s116, 1
      %s118 = scalar_select %p115, %s116, %s117
      %p121 = pneg %p115
      %p122 = scmp.eq.s32.totalorder %s21, 1
      %p123 = por %p121, %p122
      %p124 = scmp.ne.s32.totalorder %s116, %s119
      %p125 = scmp.eq.s32.totalorder %s21, 0
      %p126 = por %p124, %p125
      %p127 = scmp.ne.s32.totalorder %s116, %s119
      %p128 = scmp.eq.s32.totalorder %s26, 1
      %p129 = por %p127, %p128
      %p130 = scmp.ne.s32.totalorder %s119, %s120
      %p131 = scmp.eq.s32.totalorder %s26, 0
      %p132 = por %p130, %p131
      %p133 = scmp.ne.s32.totalorder %s119, %s120
      %p134 = scmp.eq.s32.totalorder %s27, 1
      %p135 = por %p133, %p134
      %p137 = scmp.ne.s32.totalorder %s120, %s136
      %p138 = scmp.eq.s32.totalorder %s27, 0
      %p139 = por %p137, %p138
      %s140 = ssub.s32 %s28, %s40
      %s141 = ssub.s32 %s29, %s36
      %s142 = sor.u32 %s140, %s141
      %p143 = scmp.eq.s32.totalorder %s142, 0
      %s145 = sadd.s32 %s144, 1
      %s146 = scalar_select %p143, %s144, %s145
      %p149 = pneg %p143
      %p150 = scmp.eq.s32.totalorder %s21, 1
      %p151 = por %p149, %p150
      %p152 = scmp.ne.s32.totalorder %s144, %s147
      %p153 = scmp.eq.s32.totalorder %s21, 0
      %p154 = por %p152, %p153
      %p155 = scmp.ne.s32.totalorder %s144, %s147
      %p156 = scmp.eq.s32.totalorder %s26, 1
      %p157 = por %p155, %p156
      %p158 = scmp.ne.s32.totalorder %s147, %s148
      %p159 = scmp.eq.s32.totalorder %s26, 0
      %p160 = por %p158, %p159
      %p161 = scmp.ne.s32.totalorder %s147, %s148
      %p162 = scmp.eq.s32.totalorder %s27, 1
      %p163 = por %p161, %p162
      %p165 = scmp.ne.s32.totalorder %s148, %s164
      %p166 = scmp.eq.s32.totalorder %s27, 0
      %p167 = por %p165, %p166
      %p168 = scmp.le.s32.totalorder 1, %s21
      %p169 = scmp.lt.s32.totalorder %s21, 3
      %p170 = pnand %p168, %p169
      %p171 = pneg %p170
      // Predicated region
      $region9: #{tpu_custom_call.1} parent=5 // pred_check
        _
      $region10: #{tpu_custom_call.1} parent=5 // pred_check_branch
        %173 = sbr.rel (%p170) target = $region12
      $region11: #{tpu_custom_call.1} parent=5 // pred_region
        %s174 = ssub.s32 %s21, 1
        // Predicated region
        $region13: #{tpu_custom_call.1} parent=11 // pred_check
          %p175 = pneg %p80
        $region14: #{tpu_custom_call.1} parent=11 // pred_check_branch
          %177 = sbr.rel (%p175) target = $region16
        $region15: #{tpu_custom_call.1} parent=11 // pred_region
          _
        $region16: #{tpu_custom_call.1} parent=11 // pred_fallthru
          _
        // Predicated region
        $region17: #{tpu_custom_call.1} parent=11 // pred_check
          %p178 = pneg %p106
        $region18: #{tpu_custom_call.1} parent=11 // pred_check_branch
          %180 = sbr.rel (%p178) target = $region20
        $region19: #{tpu_custom_call.1} parent=11 // pred_region
          %s182 = ssub.s32 512, 512
          %183 = vsyncadd [#allocation7], %s182
          %s184 = smul.addr %s31, 128
          %s185 = scalar_lea.hbm %s2, %s184
          %s186 = sshll.u32 [#allocation6], 4
          %s187 = int_to_ptr.vmem [resolvable:$true] %s186
          %192 = dma.hbm_to_vmem [thread:$0]  %s185, 512, %s187, [#allocation7], 128, 128, 8
        $region20: #{tpu_custom_call.1} parent=11 // pred_fallthru
          _
      $region12: #{tpu_custom_call.1} parent=5 // pred_fallthru
        _
      %p193 = scmp.lt.s32.totalorder %s21, 2
      // Predicated region
      $region21: #{tpu_custom_call.1} parent=5 // pred_check
        %p194 = pneg %p193
      $region22: #{tpu_custom_call.1} parent=5 // pred_check_branch
        %196 = sbr.rel (%p194) target = $region24
      $region23: #{tpu_custom_call.1} parent=5 // pred_region
        // Predicated region
        $region25: #{tpu_custom_call.1} parent=23 // pred_check
          %p197 = pneg %p53
        $region26: #{tpu_custom_call.1} parent=23 // pred_check_branch
          %199 = sbr.rel (%p197) target = $region28
        $region27: #{tpu_custom_call.1} parent=23 // pred_region
          %s200 = sand.u32 %s43, 1
          %s201 = scalar_lea.sflag [#allocation4], %s200
          %s202 = sand.u32 %s43, 1
          %s203 = smul.addr %s202, 8
          %s204 = scalar_lea.vmem [#allocation3], %s203
          %s206 = ssub.s32 128, 128
          %207 = vsyncadd %s201, %s206
          %s208 = smul.addr %s28, 128
          %s209 = scalar_lea.hbm %s0, %s208
          %s211 = sshll.u32 %s204, 4
          %s212 = int_to_ptr.vmem [resolvable:$true] %s211
          %214 = dma.hbm_to_vmem [thread:$0]  %s209, 128, %s212, %s201
        $region28: #{tpu_custom_call.1} parent=23 // pred_fallthru
          _
      $region24: #{tpu_custom_call.1} parent=5 // pred_fallthru
        _
      %p215 = scmp.le.s32.totalorder 1, %s21
      %p216 = scmp.lt.s32.totalorder %s21, 3
      %p217 = pnand %p215, %p216
      %p218 = pneg %p217
      // Predicated region
      $region29: #{tpu_custom_call.1} parent=5 // pred_check
        _
      $region30: #{tpu_custom_call.1} parent=5 // pred_check_branch
        %220 = sbr.rel (%p217) target = $region32
      $region31: #{tpu_custom_call.1} parent=5 // pred_region
        %s221 = ssub.s32 %s21, 1
        %s222 = sand.u32 %s46, 1
        %s223 = scalar_lea.sflag [#allocation4], %s222
        %s224 = sand.u32 %s46, 1
        %s225 = smul.addr %s224, 8
        %s226 = scalar_lea.vmem [#allocation3], %s225
        // Predicated region
        $region33: #{tpu_custom_call.1} parent=31 // pred_check
          %p227 = pneg %p59
        $region34: #{tpu_custom_call.1} parent=31 // pred_check_branch
          %229 = sbr.rel (%p227) target = $region36
        $region35: #{tpu_custom_call.1} parent=31 // pred_region
          %230 = dma.done %s223, 128
        $region36: #{tpu_custom_call.1} parent=31 // pred_fallthru
          _
        // Predicated region
        $region37: #{tpu_custom_call.1} parent=31 // pred_check
          %p231 = pneg %p106
        $region38: #{tpu_custom_call.1} parent=31 // pred_check_branch
          %233 = sbr.rel (%p231) target = $region40
        $region39: #{tpu_custom_call.1} parent=31 // pred_region
          %234 = dma.done [#allocation7], 512
        $region40: #{tpu_custom_call.1} parent=31 // pred_fallthru
          _
        %s235 = sand.u32 %s46, 1
        %s236 = scalar_lea.sflag [#allocation4], %s235
        %s237 = sand.u32 %s46, 1
        %s238 = smul.addr %s237, 8
        %s239 = scalar_lea.vmem [#allocation3], %s238
        %p240 = pneg %p59
        %p241 = pneg %p56
        %p242 = pneg %p80
        %p243 = pneg %p77
        %p244 = pneg %p106
        %p245 = pneg %p103
        %p246 = pneg %p132
        %p247 = pneg %p129
        %s248 = sand.u32 %s119, 1
        %s249 = scalar_lea.sflag [#allocation5], %s248
        %s250 = sand.u32 %s119, 1
        %s251 = smul.addr %s250, 8
        %s252 = scalar_lea.vmem [#allocation8], %s251
        %p253 = pneg %p160
        %p254 = pneg %p157
        %s255 = sand.u32 %s147, 1
        %s256 = scalar_lea.sflag [#allocation10], %s255
        %s257 = sand.u32 %s147, 1
        %s258 = smul.addr %s257, 8
        %s259 = scalar_lea.vmem [#allocation9], %s258
        %p260 = scmp.eq.s32.totalorder %s31, 0
        // Predicated region
        $region41: #{tpu_custom_call.1} parent=31 // pred_check
          %p261 = pneg %p260
        $region42: #{tpu_custom_call.1} parent=31 // pred_check_branch
          %263 = sbr.rel (%p261) target = $region44
        $region43: #{tpu_custom_call.1} parent=31 // pred_region
          %v264 = vld [vmem:[%s226] sm:$0xff]
          %v265 = vmul.f32 %v264, %v264
          %vm266 = vcmask 261120
          %v267 = vsel %vm266, %v265, 0.0
          %268 = vadd.xlane.f32.xlu0 %v267
          %v269 = vpop.xlane.xlu0 %268
          %v270 = vrcp.pop 32.0
          %v271 = vmul.f32 %v269, %v270
          %v272 = vadd.f32 %v271, 1e-06
          %v273 = vrsqrt.pop %v272
          %v274 = vmul.f32 %v264, %v273
          %v275 = vld [vmem:[%s1] sm:$0x1]
          %v277 = vlaneseq
          %v278 = vshrl.u32 %v277, 7
          %v279 = vsub.s32 0, %v278
          %v280 = vrot.slane %v275, %v279
          %v282 = vmul.f32 %v274, %v280
          %283 = vst.msk [vmem:[#allocation2] sm:$0xff] %vm266, %v282
          %284 = vst.msk [vmem:[%s252] sm:$0xff] %vm266, %v282
        $region44: #{tpu_custom_call.1} parent=31 // pred_fallthru
          _
        %v285 = vld [vmem:[#allocation2] sm:$0xff]
        %v286 = vld [vmem:[#allocation6] sm:$0xff]
        %v287 = vld [vmem:[#allocation6 + $0x8] sm:$0xff]
        %v288 = vld [vmem:[#allocation6 + $0x10] sm:$0xff]
        %v289 = vld [vmem:[#allocation6 + $0x18] sm:$0xff]
        %vm290 = vcmask 261120
        %v292 = vsel %vm290, %v285, 0
        %294 = vmatprep.subr.mxu0 0.0
        %295 = vmatpush1.msra.mxu0 %v286
        %296 = vmatprep.subr.mxu0 0.0
        %297 = vmatpush1.msra.mxu0 %v287
        %298 = vmatprep.subr.mxu0 0.0
        %299 = vmatpush1.msra.mxu0 %v288
        %300 = vmatprep.subr.mxu0 0.0
        %301 = vmatpush1.msra.mxu0 %v289
        %302 = vmatprep.subr.mxu0 0.0
        %303 = vmatpush1.msra.mxu0 0.0
        %304 = vmatprep.subr.mxu0 0.0
        %305 = vmatpush1.msra.mxu0 0.0
        %306 = vmatprep.subr.mxu0 0.0
        %307 = vmatpush1.msra.mxu0 0.0
        %308 = vmatprep.subr.mxu0 0.0
        %309 = vmatpush1.msra.mxu0 0.0
        %310 = vmatprep.subr.mxu0 0.0
        %311 = vmatpush1.msra.mxu0 0.0
        %312 = vmatprep.subr.mxu0 0.0
        %313 = vmatpush1.msra.mxu0 0.0
        %314 = vmatprep.subr.mxu0 0.0
        %315 = vmatpush1.msra.mxu0 0.0
        %316 = vmatprep.subr.mxu0 0.0
        %317 = vmatpush1.msra.mxu0 0.0
        %318 = vmatprep.subr.mxu0 0.0
        %319 = vmatpush1.msra.mxu0 0.0
        %320 = vmatprep.subr.mxu0 0.0
        %321 = vmatpush1.msra.mxu0 0.0
        %322 = vmatprep.subr.mxu0 0.0
        %323 = vmatpush1.msra.mxu0 0.0
        %324 = vmatprep.subr.mxu0 0.0
        %325 = vmatpush1.msra.mxu0 0.0
        %326 = vmatprep.subr.mxu0 0.0
        %327 = vmatpush1.msra.mxu0 0.0
        %328 = vmatprep.subr.mxu0 0.0
        %329 = vmatpush1.msra.mxu0 0.0
        %330 = vmatprep.subr.mxu0 0.0
        %331 = vmatpush1.msra.mxu0 0.0
        %332 = vmatprep.subr.mxu0 0.0
        %333 = vmatpush1.msra.mxu0 0.0
        %334 = vmatprep.subr.mxu0 0.0
        %335 = vmatpush1.msra.mxu0 0.0
        %336 = vmatprep.subr.mxu0 0.0
        %337 = vmatpush1.msra.mxu0 0.0
        %338 = vmatprep.subr.mxu0 0.0
        %339 = vmatpush1.msra.mxu0 0.0
        %340 = vmatprep.subr.mxu0 0.0
        %341 = vmatpush1.msra.mxu0 0.0
        %342 = vmatprep.subr.mxu0 0.0
        %343 = vmatpush1.msra.mxu0 0.0
        %344 = vmatprep.subr.mxu0 0.0
        %345 = vmatpush1.msra.mxu0 0.0
        %346 = vmatprep.subr.mxu0 0.0
        %347 = vmatpush1.msra.mxu0 0.0
        %348 = vmatprep.subr.mxu0 0.0
        %349 = vmatpush1.msra.mxu0 0.0
        %350 = vmatprep.subr.mxu0 0.0
        %351 = vmatpush1.msra.mxu0 0.0
        %352 = vmatprep.subr.mxu0 0.0
        %353 = vmatpush1.msra.mxu0 0.0
        %354 = vmatprep.subr.mxu0 0.0
        %355 = vmatpush1.msra.mxu0 0.0
        %356 = vmatprep.subr.mxu0 0.0
        %357 = vmatpush1.msra.mxu0 0.0
        %358 = vmatprep.mubr.f32.mxu0 0.0
        %359 = vmatmul.mubr.f32.gmra.mrb[0].mxu0 %v292
        %v360 = vpop.f32.mrb[0].mxu0
        %v361 = vadd.f32 0.0, %v360
        %v362 = vpop.f32.mrb[0].mxu0
        %363 = vdwg.mxu0
        %vm364 = vcmask 785408
        %365 = vst.msk [vmem:[%s259] sm:$0xff] %vm364, %v361
        %s366 = sand.u32 %s119, 1
        %s367 = scalar_lea.sflag [#allocation5], %s366
        %s368 = sand.u32 %s119, 1
        %s369 = smul.addr %s368, 8
        %s370 = scalar_lea.vmem [#allocation8], %s369
        %s371 = sand.u32 %s147, 1
        %s372 = scalar_lea.sflag [#allocation10], %s371
        %s373 = sand.u32 %s147, 1
        %s374 = smul.addr %s373, 8
        %s375 = scalar_lea.vmem [#allocation9], %s374
        // Predicated region
        $region45: #{tpu_custom_call.1} parent=31 // pred_check
          %p376 = pneg %p129
        $region46: #{tpu_custom_call.1} parent=31 // pred_check_branch
          %378 = sbr.rel (%p376) target = $region48
        $region47: #{tpu_custom_call.1} parent=31 // pred_region
          %s380 = ssub.s32 128, 128
          %381 = vsyncadd %s367, %s380
          %s382 = smul.addr %s30, 128
          %s383 = scalar_lea.hbm %s3, %s382
          %s385 = sshll.u32 %s370, 4
          %s386 = int_to_ptr.vmem [resolvable:$true] %s385
          %388 = dma.vmem_to_hbm [thread:$0]  %s386, 128, %s383, %s367
        $region48: #{tpu_custom_call.1} parent=31 // pred_fallthru
          _
        // Predicated region
        $region49: #{tpu_custom_call.1} parent=31 // pred_check
          %p389 = pneg %p157
        $region50: #{tpu_custom_call.1} parent=31 // pred_check_branch
          %391 = sbr.rel (%p389) target = $region52
        $region51: #{tpu_custom_call.1} parent=31 // pred_region
          %s393 = ssub.s32 128, 128
          %394 = vsyncadd %s372, %s393
          %s395 = sadd.s32 %s31, %s30
          %s396 = smul.addr %s395, 128
          %s397 = scalar_lea.hbm %s4, %s396
          %s399 = sshll.u32 %s375, 4
          %s400 = int_to_ptr.vmem [resolvable:$true] %s399
          %402 = dma.vmem_to_hbm [thread:$0]  %s400, 128, %s397, %s372
        $region52: #{tpu_custom_call.1} parent=31 // pred_fallthru
          _
      $region32: #{tpu_custom_call.1} parent=5 // pred_fallthru
        _
      %p403 = scmp.le.s32.totalorder 2, %s21
      // Predicated region
      $region53: #{tpu_custom_call.1} parent=5 // pred_check
        %p404 = pneg %p403
      $region54: #{tpu_custom_call.1} parent=5 // pred_check_branch
        %406 = sbr.rel (%p404) target = $region56
      $region55: #{tpu_custom_call.1} parent=5 // pred_region
        %s407 = ssub.s32 %s21, 2
        // Predicated region
        $region57: #{tpu_custom_call.1} parent=55 // pred_check
          %p408 = pneg %p135
        $region58: #{tpu_custom_call.1} parent=55 // pred_check_branch
          %410 = sbr.rel (%p408) target = $region60
        $region59: #{tpu_custom_call.1} parent=55 // pred_region
          %s411 = sand.u32 %s120, 1
          %s412 = scalar_lea.sflag [#allocation5], %s411
          %s413 = sand.u32 %s120, 1
          %s414 = smul.addr %s413, 8
          %s415 = scalar_lea.vmem [#allocation8], %s414
          %416 = dma.done %s412, 128
        $region60: #{tpu_custom_call.1} parent=55 // pred_fallthru
          _
        // Predicated region
        $region61: #{tpu_custom_call.1} parent=55 // pred_check
          %p417 = pneg %p163
        $region62: #{tpu_custom_call.1} parent=55 // pred_check_branch
          %419 = sbr.rel (%p417) target = $region64
        $region63: #{tpu_custom_call.1} parent=55 // pred_region
          %s420 = sand.u32 %s148, 1
          %s421 = scalar_lea.sflag [#allocation10], %s420
          %s422 = sand.u32 %s148, 1
          %s423 = smul.addr %s422, 8
          %s424 = scalar_lea.vmem [#allocation9], %s423
          %425 = dma.done %s421, 128
        $region64: #{tpu_custom_call.1} parent=55 // pred_fallthru
          _
      $region56: #{tpu_custom_call.1} parent=5 // pred_fallthru
        _
    $region6: #{tpu_custom_call.1} parent=1 // loop_footer
      %s25 = sadd.s32 1, %s21
    $region7: #{tpu_custom_call.1} parent=1 // loop_footer_branch
      %20 = sbr.rel target = $region3
    $region8: #{tpu_custom_call.1} parent=1 // loop_exit
      _
    %426 = vsyncpa [#allocation4], 1
    %s427 = scalar_lea.sflag [#allocation4], 1
    %428 = vsyncpa %s427, 1
    %429 = vsyncpa [#allocation7], 1
    %430 = vsyncpa [#allocation5], 1
    %s431 = scalar_lea.sflag [#allocation5], 1
    %432 = vsyncpa %s431, 1
    %433 = vsyncpa [#allocation10], 1
    %s434 = scalar_lea.sflag [#allocation10], 1
    %435 = vsyncpa %s434, 1

</llo_original>
